<compile_context>
chip_gen: v5e
topology: v5e:2x2
jax: 0.10.0
libtpu: 0.0.40
codegen_flags: <defaults>
</compile_context>

<pallas_src>
import functools

import jax
import jax.numpy as jnp
from jax.experimental import pallas as pl
from jax.experimental.pallas import tpu as pltpu

_EPS = 1e-6  # F.pairwise_distance default eps


def _contrastive_loss_kernel(x1_ref, x2_ref, label_ref, out_ref, *,
                             margin, batch, tile_b, label_resident):
    i = pl.program_id(0)

    x1 = x1_ref[...].astype(jnp.float32)          # (TB, D)
    x2 = x2_ref[...].astype(jnp.float32)          # (TB, D)

    if label_resident:
        # Label lives resident in VMEM (DMA'd once); slice this tile's rows.
        start = pl.multiple_of(i * tile_b, tile_b)
        label = label_ref[pl.ds(start, tile_b), :].astype(jnp.float32)   # (TB, 1)
    else:
        label = label_ref[...].astype(jnp.float32)                        # (TB, 1)

    diff = x1 - x2 + jnp.float32(_EPS)            # matches torch's (x1 - x2 + eps)
    sq_sum = jnp.sum(diff * diff, axis=-1, keepdims=True)   # (TB, 1) == d^2
    dist = jnp.sqrt(sq_sum)                                  # (TB, 1)

    # d^2 == sq_sum -> use it directly for the positive term (skip sqrt->square).
    pos_term = (1.0 - label) * sq_sum
    neg_term = label * jnp.square(jnp.maximum(jnp.float32(margin) - dist, 0.0))
    per_example = pos_term + neg_term                        # (TB, 1)

    if batch % tile_b != 0:
        # Last tile is partial: select 0.0 for padded rows (a select, so NaN/Inf
        # garbage in out-of-range rows cannot contaminate the mean).
        row = i * tile_b + jax.lax.broadcasted_iota(jnp.int32, per_example.shape, 0)
        per_example = jnp.where(row < batch, per_example, 0.0)

    # Per-tile partial sum -> lane-dense (1, 8, 128) output block.  Each grid step
    # owns its own block, so the batch axis can be "parallel" (v7x 2-TC sharding).
    partial = jnp.sum(per_example)
    out_ref[...] = jnp.full(out_ref.shape, partial, dtype=jnp.float32)


def _tpu_vmem_capacity_bytes():
    """Physical VMEM per TensorCore (generation aware), with a conservative fallback."""
    try:
        cap = getattr(pltpu.get_tpu_info(), "vmem_capacity_bytes", None)
        if cap:
            return int(cap)
    except Exception:
        pass
    return 64 * 1024 * 1024  # v7x-sized fallback: safe on every generation


def _vmem_limit_bytes():
    cap = _tpu_vmem_capacity_bytes()
    # 96 MiB on 128-MiB parts (v5e/v6e), 48 MiB on v7x (64 MiB physical).
    return int(min(cap * 3 // 4, 96 * 1024 * 1024))


def _sublane_multiple(itemsize):
    # f32 -> 8, bf16 -> 16, int8/fp8 -> 32 (packed-row alignment).
    return max(8, 32 // int(itemsize))


def _choose_batch_tile(batch, feat, itemsize):
    """Largest batch tile whose double-buffered working set fits the VMEM budget."""
    vmem_cap = _tpu_vmem_capacity_bytes()
    # Working-set budget for pipelined input tiles + f32 temporaries:
    # ~48 MiB on v5e/v6e (128 MiB physical), ~32 MiB on v7x (64 MiB physical).
    budget = min(vmem_cap // 2, 48 * 1024 * 1024)
    d_pad = pl.cdiv(feat, 128) * 128                     # lane padding to 128
    per_row = (2 * 2 * d_pad * itemsize                  # 2 inputs x 2 pipeline buffers
               + 3 * d_pad * 4                           # f32 temporaries (casts/diff/diff^2)
               + 2 * 128 * 4)                            # (TB,1) label / per-example slivers
    sub = _sublane_multiple(itemsize)
    tb = budget // per_row
    # 8192 rows already streams several MiB per step for D<=256 f32 (>=85% of the HBM
    # roofline); larger tiles only add pipeline-fill latency and last-tile imbalance.
    tb = min(tb, 8192)
    if tb >= batch:
        return batch                    # single step; block == full array dims
    # TODO(synk): for very wide D (per_row > budget) also tile the feature axis
    # (grid=(B_tiles, D_tiles), accumulate sq_sum in scratch before the margin math).
    return max(sub, (tb // sub) * sub)


def contrastive_loss(output1, output2, label, margin=2.0, tile_b=None, label_resident=None):
    """output1, output2: (B, D) float; label: (B,) {0,1}. Returns scalar float32 loss."""
    B, D = output1.shape

    if tile_b is None:
        tile_b = _choose_batch_tile(B, D, jnp.dtype(output1.dtype).itemsize)
    tile_b = int(max(1, min(tile_b, B)))
    nsteps = pl.cdiv(B, tile_b)
    padded_B = nsteps * tile_b

    label_f = label.astype(jnp.float32).reshape(B, 1)

    if label_resident is None:
        # Resident (single-DMA) label costs ~512 B/row of lane-padded VMEM; use it
        # for moderate batches, fall back to per-step streamed blocks for huge B.
        label_resident = padded_B * 512 <= 4 * 1024 * 1024
    label_resident = bool(label_resident)

    if label_resident:
        if padded_B != B:
            label_f = jnp.pad(label_f, ((0, padded_B - B), (0, 0)))
        label_spec = pl.BlockSpec((padded_B, 1), lambda i: (0, 0))
    else:
        label_spec = pl.BlockSpec((tile_b, 1), lambda i: (i, 0))

    kernel = functools.partial(
        _contrastive_loss_kernel, margin=float(margin), batch=B, tile_b=tile_b,
        label_resident=label_resident)

    partials = pl.pallas_call(
        kernel,
        out_shape=jax.ShapeDtypeStruct((nsteps, 8, 128), jnp.float32),
        grid=(nsteps,),
        in_specs=[
            pl.BlockSpec((tile_b, D), lambda i: (i, 0)),
            pl.BlockSpec((tile_b, D), lambda i: (i, 0)),
            label_spec,
        ],
        # One lane-dense (8,128) partial block per grid step -> no serial accumulator.
        out_specs=pl.BlockSpec((1, 8, 128), lambda i: (i, 0, 0)),
        compiler_params=pltpu.CompilerParams(
            dimension_semantics=("parallel",),      # v7x can shard steps across both TCs
            vmem_limit_bytes=_vmem_limit_bytes(),
        ),
    )(output1, output2, label_f)

    # Finish the reduction outside the kernel (tiny: nsteps values).
    return jnp.sum(partials[:, 0, 0]) / jnp.float32(B)


def _reference(output1, output2, label, margin=2.0):
    # Pure-JAX reference mirroring the PyTorch module.
    d = jnp.sqrt(jnp.sum((output1 - output2 + _EPS) ** 2, axis=1))
    lab = label.astype(jnp.float32)
    return jnp.mean((1.0 - lab) * d**2 + lab * jnp.maximum(margin - d, 0.0) ** 2)


if __name__ == "__main__":
    key = jax.random.PRNGKey(0)
    k1, k2, k3, k4, k5, k6 = jax.random.split(key, 6)

    # Small shape consistent with siamese-net embedding outputs.
    B, D = 8, 32
    output1 = jax.random.normal(k1, (B, D), dtype=jnp.float32)
    output2 = jax.random.normal(k2, (B, D), dtype=jnp.float32)
    label = jax.random.bernoulli(k3, 0.5, (B,)).astype(jnp.float32)

    loss = jax.block_until_ready(contrastive_loss(output1, output2, label, margin=2.0))
    ref = _reference(output1, output2, label, margin=2.0)
    assert jnp.allclose(loss, ref, rtol=1e-5, atol=1e-5), (loss, ref)

    # Exercise the batch-tiled + masked (B % TB != 0) path with the resident label.
    B2, D2, TB2 = 200, 128, 64
    o1 = jax.random.normal(k4, (B2, D2), dtype=jnp.float32)
    o2 = jax.random.normal(k5, (B2, D2), dtype=jnp.float32)
    lab2 = jax.random.bernoulli(k6, 0.5, (B2,)).astype(jnp.float32)
    ref2 = _reference(o1, o2, lab2, margin=2.0)

    loss2 = jax.block_until_ready(contrastive_loss(o1, o2, lab2, margin=2.0, tile_b=TB2))
    assert jnp.allclose(loss2, ref2, rtol=1e-5, atol=1e-5), (loss2, ref2)

    # Same shapes, per-step streamed label path (the fallback used for huge B).
    loss3 = jax.block_until_ready(
        contrastive_loss(o1, o2, lab2, margin=2.0, tile_b=TB2, label_resident=False))
    assert jnp.allclose(loss3, ref2, rtol=1e-5, atol=1e-5), (loss3, ref2)

    print("KERNEL_OK")
</pallas_src>

<mosaic_0001>
module attributes {stable_mosaic.version = 11 : i64} {
  func.func @_contrastive_loss_kernel(%arg0: i32, %arg1: memref<8x32xf32, #tpu.memory_space<vmem>>, %arg2: memref<8x32xf32, #tpu.memory_space<vmem>>, %arg3: memref<8x1xf32, #tpu.memory_space<vmem>>, %arg4: memref<1x8x128xf32, #tpu.memory_space<vmem>>) attributes {dimension_semantics = [#tpu.dimension_semantics<parallel>], iteration_bounds = array<i64: 1>, scalar_prefetch = 0 : i64, scratch_operands = 0 : i64, tpu.core_type = #tpu.core_type<tc>, window_params = [{transform_indices = @transform_0, window_bounds = array<i64: 8, 32>}, {transform_indices = @transform_1, window_bounds = array<i64: 8, 32>}, {pipeline_mode = #tpu.pipeline_mode<synchronous>, transform_indices = @transform_2, window_bounds = array<i64: 8, 1>}, {transform_indices = @transform_3, window_bounds = array<i64: 1, 8, 128>}]} {
    %c0 = arith.constant 0 : index
    %c0_0 = arith.constant 0 : index
    %0 = vector.load %arg1[%c0, %c0_0] : memref<8x32xf32, #tpu.memory_space<vmem>>, vector<8x32xf32>
    %c0_1 = arith.constant 0 : index
    %c0_2 = arith.constant 0 : index
    %1 = vector.load %arg2[%c0_1, %c0_2] : memref<8x32xf32, #tpu.memory_space<vmem>>, vector<8x32xf32>
    %c8_i32 = arith.constant 8 : i32
    %2 = arith.muli %arg0, %c8_i32 : i32
    %3 = tpu.assume_multiple %2, 8 : i32
    %4 = arith.index_cast %3 : i32 to index
    %c0_3 = arith.constant 0 : index
    %5 = vector.load %arg3[%4, %c0_3] : memref<8x1xf32, #tpu.memory_space<vmem>>, vector<8x1xf32>
    %6 = arith.subf %0, %1 : vector<8x32xf32>
    %cst = arith.constant 9.99999997E-7 : f32
    %7 = vector.broadcast %cst : f32 to vector<8x32xf32>
    %8 = arith.addf %6, %7 : vector<8x32xf32>
    %9 = arith.mulf %8, %8 : vector<8x32xf32>
    %cst_4 = arith.constant dense<0.000000e+00> : vector<8xf32>
    %10 = vector.multi_reduction <add>, %9, %cst_4 [1] : vector<8x32xf32> to vector<8xf32>
    %11 = vector.shape_cast %10 : vector<8xf32> to vector<8x1xf32>
    %12 = math.sqrt %11 : vector<8x1xf32>
    %cst_5 = arith.constant 1.000000e+00 : f32
    %13 = vector.broadcast %cst_5 : f32 to vector<8x1xf32>
    %14 = arith.subf %13, %5 : vector<8x1xf32>
    %15 = arith.mulf %14, %11 : vector<8x1xf32>
    %cst_6 = arith.constant 2.000000e+00 : f32
    %16 = vector.broadcast %cst_6 : f32 to vector<8x1xf32>
    %17 = arith.subf %16, %12 : vector<8x1xf32>
    %cst_7 = arith.constant 0.000000e+00 : f32
    %18 = vector.broadcast %cst_7 : f32 to vector<8x1xf32>
    %19 = arith.maximumf %17, %18 : vector<8x1xf32>
    %20 = arith.mulf %19, %19 : vector<8x1xf32>
    %21 = arith.mulf %5, %20 : vector<8x1xf32>
    %22 = arith.addf %15, %21 : vector<8x1xf32>
    %23 = vector.shape_cast %22 : vector<8x1xf32> to vector<1x8x1xf32>
    %cst_8 = arith.constant dense<0.000000e+00> : vector<1xf32>
    %24 = vector.multi_reduction <add>, %23, %cst_8 [1, 2] : vector<1x8x1xf32> to vector<1xf32>
    %25 = vector.shape_cast %24 : vector<1xf32> to vector<1x1x1xf32>
    %26 = vector.extract %25[0, 0, 0] : f32 from vector<1x1x1xf32>
    %27 = vector.broadcast %26 : f32 to vector<1x8x128xf32>
    %c0_9 = arith.constant 0 : index
    %c0_10 = arith.constant 0 : index
    %c0_11 = arith.constant 0 : index
    %28 = vector.load %arg4[%c0_9, %c0_10, %c0_11] : memref<1x8x128xf32, #tpu.memory_space<vmem>>, vector<1x8x128xf32>
    tpu.vector_store %arg4[%c0_9, %c0_10, %c0_11], %27 {strides = array<i32>} : memref<1x8x128xf32, #tpu.memory_space<vmem>>, vector<1x8x128xf32>,
    return
  }
  func.func @transform_0(%arg0: i32) -> (i32, i32) {
    %c0_i32 = arith.constant 0 : i32
    %c0_i32_0 = arith.constant 0 : i32
    return %arg0, %c0_i32 : i32, i32
  }
  func.func @transform_1(%arg0: i32) -> (i32, i32) {
    %c0_i32 = arith.constant 0 : i32
    %c0_i32_0 = arith.constant 0 : i32
    return %arg0, %c0_i32 : i32, i32
  }
  func.func @transform_2(%arg0: i32) -> (i32, i32) {
    %c0_i32 = arith.constant 0 : i32
    %c0_i32_0 = arith.constant 0 : i32
    %c0_i32_1 = arith.constant 0 : i32
    return %c0_i32, %c0_i32_0 : i32, i32
  }
  func.func @transform_3(%arg0: i32) -> (i32, i32, i32) {
    %c0_i32 = arith.constant 0 : i32
    %c0_i32_0 = arith.constant 0 : i32
    %c0_i32_1 = arith.constant 0 : i32
    return %arg0, %c0_i32, %c0_i32_0 : i32, i32, i32
  }
}

</mosaic_0001>

<llo_original>
// kernel: tpu_custom_call.1
$region0: #{tpu_custom_call.1}
  #allocation0 [shape = 'u32[]', space=smem, size = 0x4, offset = 0x4, fixed_abs, tag = 'smem constant byte address 0x4 - core index']
  #allocation1 [shape = 'u32[72,128]{1,0:T(1,128)}', space=vmem, size = 0x9000, scoped, tag = 'internal scratch']
  %s0 = inlined_call_operand.vmem [shape: f32[8,32], index: 0, kind: input, shape index: {}]
  %s1 = inlined_call_operand.hbm [shape: f32[8,32], index: 1, kind: input, shape index: {}]
  %s2 = inlined_call_operand.vmem [shape: f32[8,1], index: 2, kind: input, shape index: {}]
  %s3 = inlined_call_operand.hbm [shape: f32[1,8,128], index: 3, kind: output, shape index: {}]
  %s4 = sld [smem:[#allocation0]]
  $region26: #{tpu_custom_call.1} parent=0
    _
  %s6 = ssub.s32 1, %s4
  %s7 = scalar_select 0, %s6, %s4
  $region1: #{tpu_custom_call.1} parent=0
    #allocation2 [shape = 'u8[4096]{0}', space=vmem, size = 0x1000, scoped, tag = 'input window, operand 1, single buffered']
    #allocation3 [shape = 's32[1]{0}', space=sflag, size = 0x4, scoped, tag = 'scoped memory for tpu_custom_call.1']
    #allocation4 [shape = 's32[1]{0}', space=sflag, size = 0x4, scoped, tag = 'scoped memory for tpu_custom_call.1']
    #allocation5 [shape = 'u8[4096]{0}', space=vmem, size = 0x1000, scoped, tag = 'output window, operand 0, single buffered']
    %8 = vsyncpa [#allocation3], 0
    %9 = vsyncpa [#allocation4], 0
    // Predicated region
    $region2: #{tpu_custom_call.1} parent=1 // pred_check
      _
    $region3: #{tpu_custom_call.1} parent=1 // pred_check_branch
      %11 = sbr.rel (0) target = $region5
    $region4: #{tpu_custom_call.1} parent=1 // pred_region
      _
    $region5: #{tpu_custom_call.1} parent=1 // pred_fallthru
      _
    // Predicated region
    $region6: #{tpu_custom_call.1} parent=1 // pred_check
      _
    $region7: #{tpu_custom_call.1} parent=1 // pred_check_branch
      %13 = sbr.rel (0) target = $region9
    $region8: #{tpu_custom_call.1} parent=1 // pred_region
      %15 = vsyncadd [#allocation3], 0
      %s17 = sshll.u32 %s1, 4
      %s18 = int_to_ptr.hbm [resolvable:$true] %s17
      %s19 = sshll.u32 [#allocation2], 4
      %s20 = int_to_ptr.vmem [resolvable:$true] %s19
      %22 = dma.hbm_to_vmem [thread:$0]  %s18, 128, %s20, [#allocation3]
    $region9: #{tpu_custom_call.1} parent=1 // pred_fallthru
      _
    // Predicated region
    $region10: #{tpu_custom_call.1} parent=1 // pred_check
      _
    $region11: #{tpu_custom_call.1} parent=1 // pred_check_branch
      %24 = sbr.rel (0) target = $region13
    $region12: #{tpu_custom_call.1} parent=1 // pred_region
      _
    $region13: #{tpu_custom_call.1} parent=1 // pred_fallthru
      _
    // Predicated region
    $region14: #{tpu_custom_call.1} parent=1 // pred_check
      _
    $region15: #{tpu_custom_call.1} parent=1 // pred_check_branch
      %26 = sbr.rel (0) target = $region17
    $region16: #{tpu_custom_call.1} parent=1 // pred_region
      %28 = dma.done [#allocation3], 128
    $region17: #{tpu_custom_call.1} parent=1 // pred_fallthru
      _
    %v29 = vld [vmem:[%s0] sm:$0xff]
    %v30 = vld [vmem:[#allocation2] sm:$0xff]
    %s31 = smul.u32 0, 8
    %s32 = scalar_lea.vmem %s2, %s31
    %v33 = vld [vmem:[%s32] sm:$0xff]
    %v34 = vsub.f32 %v29, %v30
    %v35 = vadd.f32 %v34, 1e-06
    %v36 = vmul.f32 %v35, %v35
    %vm37 = vcmask 261120
    %v38 = vsel %vm37, %v36, 0.0
    %39 = vadd.xlane.f32.xlu0 %v38
    %v40 = vpop.xlane.xlu0 %39
    %v41 = vrsqrt.pop %v40
    %v42 = vmul.f32 %v41, %v40
    %v43 = vmul.f32 %v42, %v41
    %v44 = vmul.f32 0.5, %v43
    %v45 = vsub.f32 1.5, %v44
    %v46 = vmul.f32 %v41, %v45
    %v47 = vmul.f32 %v40, %v46
    %vm48 = vcmp.eq.f32.partialorder %v40, inf
    %v49 = vsel %vm48, %v40, %v47
    %vm50 = vcmp.eq.f32.partialorder %v40, 0.0
    %v51 = vand.u32 %v40, 2147483648
    %v52 = vsel %vm50, %v51, %v49
    %v53 = vsub.f32 1.0, %v33
    %v54 = vmul.f32 %v53, %v40
    %v55 = vsub.f32 2.0, %v52
    %v56 = vmax.f32 %v55, 0.0
    %v57 = vmul.f32 %v56, %v56
    %v58 = vmul.f32 %v33, %v57
    %v59 = vadd.f32 %v54, %v58
    %vm60 = vcmask 7168
    %v61 = vsel %vm60, %v59, 0.0
    %62 = vadd.xlane.f32.xlu0 %v61
    %v63 = vpop.xlane.xlu0 %62
    %v64 = vrot.slane %v63, 4
    %v65 = vadd.f32 %v63, %v64
    %v66 = vrot.slane %v65, 2
    %v67 = vadd.f32 %v65, %v66
    %v68 = vrot.slane %v67, 1
    %v69 = vadd.f32 %v67, %v68
    %s70 = vtos %v69
    %v71 = vstv %s70
    %72 = vst [vmem:[#allocation5] sm:$0xff] %v71
    // Predicated region
    $region18: #{tpu_custom_call.1} parent=1 // pred_check
      _
    $region19: #{tpu_custom_call.1} parent=1 // pred_check_branch
      %74 = sbr.rel (0) target = $region21
    $region20: #{tpu_custom_call.1} parent=1 // pred_region
      %76 = vsyncadd [#allocation4], 0
      %s78 = sshll.u32 [#allocation5], 4
      %s79 = int_to_ptr.vmem [resolvable:$true] %s78
      %s80 = sshll.u32 %s3, 4
      %s81 = int_to_ptr.hbm [resolvable:$true] %s80
      %83 = dma.vmem_to_hbm [thread:$0]  %s79, 128, %s81, [#allocation4]
    $region21: #{tpu_custom_call.1} parent=1 // pred_fallthru
      _
    // Predicated region
    $region22: #{tpu_custom_call.1} parent=1 // pred_check
      _
    $region23: #{tpu_custom_call.1} parent=1 // pred_check_branch
      %85 = sbr.rel (0) target = $region25
    $region24: #{tpu_custom_call.1} parent=1 // pred_region
      %87 = dma.done [#allocation4], 128
    $region25: #{tpu_custom_call.1} parent=1 // pred_fallthru
      _
    %88 = vsyncpa [#allocation3], 1
    %89 = vsyncpa [#allocation4], 1

</llo_original>
